<compile_context>
chip_gen: v7x
topology: tpu7x:2x2x1
jax: 0.10.0
libtpu: 0.0.40
codegen_flags: <defaults>
</compile_context>

<pallas_src>
import math
from functools import lru_cache

import jax
import jax.numpy as jnp
from jax.experimental import pallas as pl
from jax.experimental.pallas import tpu as pltpu


# ------------------------------------------------------------------ generation constants
def _detect_vmem_capacity_bytes() -> int:
    try:
        info = pltpu.get_tpu_info()
        v = getattr(info, "vmem_capacity_bytes", None)
        if v:
            return int(v)
    except Exception:
        pass
    return 64 * 1024 * 1024  # assume the tightest generation (v7x: 64 MiB per TC)


_PHYS_VMEM_BYTES = _detect_vmem_capacity_bytes()
_ROOMY_VMEM = _PHYS_VMEM_BYTES >= 100 * 1024 * 1024          # v5e / v6e (128 MiB physical)

_VMEM_LIMIT_BYTES = (64 if _ROOMY_VMEM else 40) * 1024 * 1024  # explicit scoped-VMEM cap
_COPY_BLOCK_BYTES = (8 if _ROOMY_VMEM else 4) * 1024 * 1024    # relocation-path block budget
_SLAB_TILE_BYTES = (4 if _ROOMY_VMEM else 2) * 1024 * 1024     # slab-path tile budget
_SMALL_BYPASS_BYTES = 512 * 1024                               # below this: jnp.transpose


def _square_tile(itemsize: int) -> int:
    # 1024^2 f32 = 4 MiB / tile (2 bufs x in+out = 16 MiB); bf16 can go 2048 (8 MiB tiles,
    # 32 MiB footprint) where physical VMEM is 128 MiB, but not on v7x's 64 MiB.
    if itemsize <= 2 and _ROOMY_VMEM:
        return 2048
    return 1024


def _cost(nbytes: int) -> pl.CostEstimate:
    # Pure-bandwidth op: no flops to hide.
    return pl.CostEstimate(flops=0, transcendentals=0, bytes_accessed=nbytes)


def _params(grid_rank: int) -> pltpu.CompilerParams:
    # Every grid step writes a distinct output block -> all axes are megacore-parallel.
    return pltpu.CompilerParams(
        dimension_semantics=("parallel",) * grid_rank,
        vmem_limit_bytes=_VMEM_LIMIT_BYTES,
    )


# ------------------------------------------------------------------------------ kernels
def _transpose_kernel(x_ref, o_ref):
    # (TR, TC) -> (TC, TR): clean 2-D tile transpose (XLU), lane-dense on both sides
    # whenever R, C >= 128.
    o_ref[...] = x_ref[...].T


def _transpose_slab_kernel(x_ref, o_ref):
    # (R, TC) -> (1, TC*R): same bytes as the (TC, R) transpose but presented as a
    # lane-dense slab so stores are full-width vst instead of masked R-lane stores.
    # Tile bytes are capped (_SLAB_TILE_BYTES) so a materialized in-VMEM relayout of the
    # merged minor dims stays small even on v7x.
    r, c = x_ref.shape
    o_ref[...] = x_ref[...].T.reshape(1, r * c)


def _copy_kernel(x_ref, o_ref):
    # Pure relocation: the permutation lives entirely in the out_spec index_map.
    o_ref[...] = x_ref[...]


# ------------------------------------------------------------------- slab path machinery
def _make_slab_call(B: int, R: int, C: int, TC: int, dtype):
    nC = C // TC
    itemsize = jnp.dtype(dtype).itemsize
    return pl.pallas_call(
        _transpose_slab_kernel,
        out_shape=jax.ShapeDtypeStruct((B, nC, TC * R), dtype),
        grid=(B, nC),
        in_specs=[pl.BlockSpec((None, R, TC), lambda b, j: (b, 0, j))],
        out_specs=pl.BlockSpec((None, 1, TC * R), lambda b, j: (b, j, 0)),
        compiler_params=_params(2),
        cost_estimate=_cost(2 * B * R * C * itemsize),
    )


@lru_cache(maxsize=None)
def _slab_supported(B: int, R: int, C: int, TC: int, dtype_str: str) -> bool:
    # Static capability gate: compile a standalone instance of the exact slab call once
    # (cached per shape signature). This is evaluated at trace time, so the fallback
    # fires deterministically even when permute_pallas runs under an enclosing jax.jit
    # (where a try/except around the real pallas_call could never catch the Mosaic
    # compile error).
    dtype = jnp.dtype(dtype_str)
    try:
        call = _make_slab_call(B, R, C, TC, dtype)
        jax.jit(call).lower(jax.ShapeDtypeStruct((B, R, C), dtype)).compile()
        return True
    except Exception:
        return False


def _slab_tc(B: int, R: int, C: int, itemsize: int):
    """Largest multiple-of-128 divisor of C whose (R, TC) tile fits the slab byte budget;
    shrunk (by halving) if the (B, nC) grid would be too small to feed both v7x cores."""
    lane_budget = (_SLAB_TILE_BYTES // max(1, R * itemsize)) // 128 * 128
    if lane_budget < 128:
        return None
    tc = min(C, lane_budget)
    tc -= tc % 128
    best = None
    while tc >= 128:
        if C % tc == 0:
            best = tc
            break
        tc -= 128
    if best is None:
        return None
    # Keep at least a couple of grid steps so both TensorCores (v7x) get work.
    while B * (C // best) < 2 and best % 256 == 0:
        best //= 2
    return best


# -------------------------------------------------------------------- tiled 2-D transpose
def _batched_transpose(xb: jax.Array) -> jax.Array:
    """(B, R, C) -> (B, C, R) as a tiled, pipelined Pallas transpose."""
    B, R, C = xb.shape
    itemsize = xb.dtype.itemsize
    cost = _cost(2 * xb.size * itemsize)

    # Lane-dense output slab: when the output minor dim (R) is narrow (<128), emit the
    # result as (B, nC, TC*R) -- bit-identical memory layout to (B, C, R) -- so the final
    # reshape is free and every store is full-width.
    if R < 128 and C >= 128 and C % 128 == 0:
        TC = _slab_tc(B, R, C, itemsize)
        if TC is not None and _slab_supported(B, R, C, TC, str(xb.dtype)):
            out = _make_slab_call(B, R, C, TC, xb.dtype)(xb)
            return out.reshape(B, C, R)

    # Plain tiled transpose (also the deterministic fallback for the slab path).
    tgt = _square_tile(itemsize)
    TR = R if R <= tgt else tgt
    TC = C if C <= tgt else tgt
    nR, nC = pl.cdiv(R, TR), pl.cdiv(C, TC)
    return pl.pallas_call(
        _transpose_kernel,
        out_shape=jax.ShapeDtypeStruct((B, C, R), xb.dtype),
        grid=(B, nR, nC),
        in_specs=[pl.BlockSpec((None, TR, TC), lambda b, i, j: (b, i, j))],
        out_specs=pl.BlockSpec((None, TC, TR), lambda b, i, j: (b, j, i)),
        compiler_params=_params(3),
        cost_estimate=cost,
    )(xb)


# --------------------------------------------------------- minor-dim-fixed pure relocation
def _minor_fixed_copy(xb: jax.Array, perm: tuple[int, ...]) -> jax.Array:
    """xb: (B, g_0, ..., g_{m-1}); perm permutes range(m) with perm[-1] == m-1.
    Pure DMA relocation: copy kernel, permutation expressed in the out_spec index_map."""
    B = xb.shape[0]
    gshape = xb.shape[1:]
    m = len(perm)
    L = gshape[-1]
    itemsize = xb.dtype.itemsize

    # Sub-128-lane minor group -> every store would be a masked vst.msk (the documented
    # biggest single penalty); XLA's fused transpose handles these shapes better.
    if L < 128:
        return jnp.transpose(xb, (0,) + tuple(1 + p for p in perm))

    # Exactly one moved group can carry a >1 block while the kernel stays a pure copy
    # (its relative order w.r.t. the minor group is preserved on both sides):
    #   perm[-2] : output-adjacent group  -> contiguous output chunks of T*L
    #   m-2      : input-adjacent group   -> contiguous input chunks of T*L
    # Pick the larger extent: bigger blocks, fewer grid steps, longer DMA segments.
    # (After coalescing perm[-2] != m-2 always.)
    cand = (perm[-2], m - 2)
    blk_grp = max(cand, key=lambda g: gshape[g])
    ext = gshape[blk_grp]

    rows_budget = max(1, _COPY_BLOCK_BYTES // max(1, L * itemsize))
    if ext <= rows_budget:
        T = ext                                      # full extent -> single tile
    else:
        T = max(8, (rows_budget // 8) * 8)           # multiple of 8 (sublane rule)
    n_t = pl.cdiv(ext, T)

    others = [g for g in range(m - 1) if g != blk_grp]   # remaining moved groups (block=1)
    grid = (B,) + tuple(gshape[g] for g in others) + (n_t,)

    out_pos = perm.index(blk_grp)                    # position of blk_grp in the output

    def in_index_map(b, *rest):
        gidx, t = rest[:-1], rest[-1]
        idx = [b]
        for g in range(m - 1):
            idx.append(t if g == blk_grp else gidx[others.index(g)])
        idx.append(0)
        return tuple(idx)

    def out_index_map(b, *rest):
        gidx, t = rest[:-1], rest[-1]
        idx = [b]
        for g in perm[:-1]:
            idx.append(t if g == blk_grp else gidx[others.index(g)])
        idx.append(0)
        return tuple(idx)

    in_block = [None] * (m + 1)
    in_block[1 + blk_grp] = T
    in_block[m] = L
    out_block = [None] * (m + 1)
    out_block[1 + out_pos] = T
    out_block[m] = L

    out_shape = (B,) + tuple(gshape[p] for p in perm)
    return pl.pallas_call(
        _copy_kernel,
        out_shape=jax.ShapeDtypeStruct(out_shape, xb.dtype),
        grid=grid,
        in_specs=[pl.BlockSpec(tuple(in_block), in_index_map)],
        out_specs=pl.BlockSpec(tuple(out_block), out_index_map),
        compiler_params=_params(len(grid)),
        cost_estimate=_cost(2 * xb.size * itemsize),
    )(xb)


# ----------------------------------------------------------------------------- entry point
def permute_pallas(x: jax.Array, dims: tuple[int, ...]) -> jax.Array:
    """Pallas equivalent of torch.Tensor.permute(*dims)."""
    n = x.ndim
    dims = tuple(d % n for d in dims)
    assert sorted(dims) == list(range(n)), "dims must be a permutation of the input axes"
    out_shape = tuple(x.shape[d] for d in dims)

    if n <= 1 or dims == tuple(range(n)) or x.size == 0:
        return x.reshape(out_shape)

    # Small-input bypass: kernel-launch + pipeline-prologue cost dominates tiny tensors.
    if x.size * x.dtype.itemsize < _SMALL_BYPASS_BYTES:
        return jnp.transpose(x, dims)

    # Canonicalize: drop size-1 axes, coalesce axes that remain consecutive.
    keep = [a for a in range(n) if x.shape[a] != 1]
    if len(keep) <= 1:
        return x.reshape(out_shape)
    rank = {a: i for i, a in enumerate(keep)}
    red_shape = tuple(x.shape[a] for a in keep)
    red_dims = tuple(rank[d] for d in dims if x.shape[d] != 1)

    groups = []                                      # coalesced input-axis groups, output order
    for d in red_dims:
        if groups and d == groups[-1][-1] + 1:
            groups[-1].append(d)
        else:
            groups.append([d])
    if len(groups) == 1:
        return x.reshape(out_shape)
    groups_in = sorted(groups, key=lambda g: g[0])   # groups in input order
    g_shape = tuple(math.prod(red_shape[a] for a in g) for g in groups_in)
    gperm = tuple(groups_in.index(g) for g in groups)

    # Fold the (single, post-coalescing) leading identity group into a batch axis.
    if gperm[0] == 0:
        batch = g_shape[0]
        rest_shape = g_shape[1:]
        rest_perm = tuple(p - 1 for p in gperm[1:])
    else:
        batch = 1
        rest_shape = g_shape
        rest_perm = gperm
    xb = x.reshape((batch,) + rest_shape)
    m = len(rest_perm)

    if m == 2:                                       # 2-group swap (rotations incl. NCHW<->NHWC)
        out = _batched_transpose(xb)
    elif rest_perm[-1] == m - 1:                     # minor axis untouched: pure relocation
        out = _minor_fixed_copy(xb, rest_perm)
    else:
        # General case: rotation (tiled 2-D transpose) followed by a minor-fixed copy.
        # TODO(synk): fold the second relocation into the transpose's out_spec index_map
        #             to avoid the second HBM pass; exotic permutations only.
        q = rest_perm[-1]
        rot = tuple(range(q + 1, m)) + tuple(range(q + 1))
        y = permute_pallas(xb, (0,) + tuple(1 + a for a in rot))
        inv = {a: i for i, a in enumerate(rot)}
        fix = tuple(inv[p] for p in rest_perm)       # keeps the minor axis fixed
        out = permute_pallas(y, (0,) + tuple(1 + f for f in fix))

    return out.reshape(out_shape)


class PermuteLayer:
    """Drop-in functional equivalent of the PyTorch PermuteLayer module."""

    def __init__(self, dims: tuple[int, ...]) -> None:
        self.dims = tuple(dims)

    def __call__(self, x: jax.Array) -> jax.Array:
        return permute_pallas(x, self.dims)


if __name__ == "__main__":
    root = jax.random.PRNGKey(0)
    keys = jax.random.split(root, 8)

    def check(x, dims, name):
        out = jax.block_until_ready(permute_pallas(x, dims))
        ref = jnp.transpose(x, dims)
        assert out.shape == ref.shape and out.dtype == ref.dtype, name
        assert jnp.array_equal(out, ref), f"mismatch vs reference: {name}"

    # 1. Primary transformer use-case at module-scale shapes: NCHW -> NHWC (small bypass).
    layer = PermuteLayer((0, 2, 3, 1))
    x1 = jax.random.normal(keys[0], (2, 4, 16, 16), dtype=jnp.float32)
    out1 = jax.block_until_ready(layer(x1))
    ref1 = jnp.transpose(x1, (0, 2, 3, 1))
    assert out1.shape == ref1.shape and jnp.array_equal(out1, ref1), "NCHW->NHWC small"

    # 2. NCHW -> NHWC above the bypass: lane-dense slab transpose path (R = 8).
    check(jax.random.normal(keys[1], (2, 8, 96, 128), jnp.float32), (0, 2, 3, 1),
          "NCHW->NHWC slab R=8")

    # 3. Same with channels=4 (exercises the slab compile-probe / deterministic fallback).
    check(jax.random.normal(keys[2], (2, 4, 128, 160), jnp.float32), (0, 2, 3, 1),
          "NCHW->NHWC slab probe R=4")

    # 4. Plain tiled transpose with ragged edge tiles (non-divisible R and C).
    check(jax.random.normal(keys[3], (1, 1100, 1280), jnp.float32), (0, 2, 1),
          "ragged tiled transpose")

    # 5. Minor-dim-fixed permutation with a lane-dense minor group (Pallas relocation).
    check(jax.random.normal(keys[4], (2, 8, 96, 128), jnp.float32), (0, 2, 1, 3),
          "minor-fixed relocation")

    # 6. Minor-dim-fixed with a sub-128-lane minor group (routed to XLA by design).
    check(jax.random.normal(keys[5], (2, 4, 6, 8), jnp.float32), (0, 2, 1, 3),
          "minor-fixed small-L")

    # 7. Full reversal: two-pass decomposition (tiled transpose + relocation).
    check(jax.random.normal(keys[6], (128, 48, 64), jnp.float32), (2, 1, 0),
          "full reversal")

    print("KERNEL_OK")
</pallas_src>

<mosaic_0001>
module attributes {stable_mosaic.version = 11 : i64} {
  func.func @_transpose_kernel(%arg0: i32, %arg1: i32, %arg2: i32, %arg3: memref<1x8x1024xf32, #tpu.memory_space<vmem>>, %arg4: memref<1x1024x8xf32, #tpu.memory_space<vmem>>) attributes {dimension_semantics = [#tpu.dimension_semantics<parallel>, #tpu.dimension_semantics<parallel>, #tpu.dimension_semantics<parallel>], iteration_bounds = array<i64: 2, 1, 12>, scalar_prefetch = 0 : i64, scratch_operands = 0 : i64, tpu.core_type = #tpu.core_type<tc>, window_params = [{transform_indices = @transform_0, window_bounds = array<i64: 1, 8, 1024>}, {transform_indices = @transform_1, window_bounds = array<i64: 1, 1024, 8>}]} {
    %c0 = arith.constant 0 : index
    %c0_0 = arith.constant 0 : index
    %c0_1 = arith.constant 0 : index
    %0 = vector.load %arg3[%c0, %c0_0, %c0_1] : memref<1x8x1024xf32, #tpu.memory_space<vmem>>, vector<1x8x1024xf32>
    %1 = vector.shape_cast %0 : vector<1x8x1024xf32> to vector<8x1024xf32>
    %2 = tpu.transpose %1, [1, 0] : vector<8x1024xf32> -> vector<1024x8xf32>
    %c0_2 = arith.constant 0 : index
    %c0_3 = arith.constant 0 : index
    %c0_4 = arith.constant 0 : index
    %3 = vector.load %arg4[%c0_2, %c0_3, %c0_4] : memref<1x1024x8xf32, #tpu.memory_space<vmem>>, vector<1x1024x8xf32>
    %4 = vector.shape_cast %3 : vector<1x1024x8xf32> to vector<1024x8xf32>
    %5 = vector.shape_cast %2 : vector<1024x8xf32> to vector<1x1024x8xf32>
    tpu.vector_store %arg4[%c0_2, %c0_3, %c0_4], %5 {strides = array<i32>} : memref<1x1024x8xf32, #tpu.memory_space<vmem>>, vector<1x1024x8xf32>,
    return
  }
  func.func @transform_0(%arg0: i32, %arg1: i32, %arg2: i32) -> (i32, i32, i32) {
    %c0_i32 = arith.constant 0 : i32
    return %arg0, %arg1, %arg2 : i32, i32, i32
  }
  func.func @transform_1(%arg0: i32, %arg1: i32, %arg2: i32) -> (i32, i32, i32) {
    %c0_i32 = arith.constant 0 : i32
    return %arg0, %arg2, %arg1 : i32, i32, i32
  }
}

</mosaic_0001>

<llo_original>
// kernel: tpu_custom_call.1
$region0: #{tpu_custom_call.1}
  #allocation0 [shape = 'u32[]', space=smem, size = 0x4, offset = 0x4, fixed_abs, tag = 'smem constant byte address 0x4 - core index']
  #allocation1 [shape = 'u32[144,128]{1,0:T(1,128)}', space=vmem, size = 0x12000, scoped, tag = 'internal scratch']
  %s0 = inlined_call_operand.hbm [shape: f32[2,8,12288], index: 0, kind: input, shape index: {}]
  %s1 = inlined_call_operand.vmem [shape: f32[2,12288,8], index: 1, kind: output, shape index: {}]
  %s2 = sld [smem:[#allocation0]]
  $region41: #{tpu_custom_call.1} parent=0
    _
  %s4 = ssub.s32 1, %s2
  %s5 = scalar_select 0, %s4, %s2
  $region1: #{tpu_custom_call.1} parent=0
    #allocation2 [shape = 'u8[65536]{0}', space=vmem, size = 0x10000, scoped, tag = 'input window, operand 0']
    #allocation3 [shape = 's32[2]{0}', space=sflag, size = 0x8, scoped, tag = 'scoped memory for tpu_custom_call.1']
    %6 = vsyncpa [#allocation3], 0
    %s7 = scalar_lea.sflag [#allocation3], 1
    %8 = vsyncpa %s7, 0
    loop: start=0, step=1, limit=26
    $region2: #{tpu_custom_call.1} parent=1 // loop_pre_header
      _
    $region3: #{tpu_custom_call.1} parent=1 // loop_header
      %s10 = sphi 0, %s14
      %p11 = scmp.ge.s32.totalorder %s10, 26
      %s17 = sphi 0, %s36
      %s18 = sphi 0, %s32
      %s19 = sphi 0, %s28
      %s20 = sphi 0, %s17
      %s21 = sphi 0, %s18
      %s22 = sphi 0, %s19
      %s23 = sphi 0, %s20
      %s24 = sphi 0, %s21
      %s25 = sphi 0, %s22
      %s43 = sphi 0, %s45
      %s46 = sphi 0, %s43
      %s47 = sphi 0, %s46
      %s63 = sphi 0, %s47
      %s73 = sphi 0, %s75
      %s76 = sphi 0, %s73
      %s77 = sphi 0, %s76
      %s93 = sphi 0, %s77
    $region4: #{tpu_custom_call.1} parent=1 // loop_header_branch
      %13 = sbr.rel (%p11) target = $region8
    $region5: #{tpu_custom_call.1} parent=1 // loop_body
      %s15 = ssub.s32 %s10, 1
      %s16 = ssub.s32 %s10, 2
      %s26 = sadd.s32 1, %s19
      %p27 = scmp.ge.s32.totalorder %s26, 12
      %s28 = scalar_select %p27, 0, %s26
      %s29 = sadd.s32 1, %s18
      %s30 = scalar_select %p27, %s29, %s18
      %p31 = scmp.ge.s32.totalorder %s30, 1
      %s32 = scalar_select %p31, 0, %s30
      %s33 = sadd.s32 1, %s17
      %s34 = scalar_select %p31, %s33, %s17
      %p35 = scmp.ge.s32.totalorder %s34, 2
      %s36 = scalar_select %p35, 0, %s34
      %s37 = ssub.s32 %s17, %s36
      %s38 = ssub.s32 %s18, %s32
      %s39 = sor.u32 %s37, %s38
      %s40 = ssub.s32 %s19, %s28
      %s41 = sor.u32 %s39, %s40
      %p42 = scmp.eq.s32.totalorder %s41, 0
      %s44 = sadd.s32 %s43, 1
      %s45 = scalar_select %p42, %s43, %s44
      %p48 = pneg %p42
      %p49 = scmp.eq.s32.totalorder %s10, 23
      %p50 = por %p48, %p49
      %p51 = scmp.ne.s32.totalorder %s43, %s46
      %p52 = scmp.eq.s32.totalorder %s10, 0
      %p53 = por %p51, %p52
      %p54 = scmp.ne.s32.totalorder %s43, %s46
      %p55 = scmp.eq.s32.totalorder %s15, 23
      %p56 = por %p54, %p55
      %p57 = scmp.ne.s32.totalorder %s46, %s47
      %p58 = scmp.eq.s32.totalorder %s15, 0
      %p59 = por %p57, %p58
      %p60 = scmp.ne.s32.totalorder %s46, %s47
      %p61 = scmp.eq.s32.totalorder %s16, 23
      %p62 = por %p60, %p61
      %p64 = scmp.ne.s32.totalorder %s47, %s63
      %p65 = scmp.eq.s32.totalorder %s16, 0
      %p66 = por %p64, %p65
      %s67 = ssub.s32 %s17, %s36
      %s68 = ssub.s32 %s19, %s28
      %s69 = sor.u32 %s67, %s68
      %s70 = ssub.s32 %s18, %s32
      %s71 = sor.u32 %s69, %s70
      %p72 = scmp.eq.s32.totalorder %s71, 0
      %s74 = sadd.s32 %s73, 1
      %s75 = scalar_select %p72, %s73, %s74
      %p78 = pneg %p72
      %p79 = scmp.eq.s32.totalorder %s10, 23
      %p80 = por %p78, %p79
      %p81 = scmp.ne.s32.totalorder %s73, %s76
      %p82 = scmp.eq.s32.totalorder %s10, 0
      %p83 = por %p81, %p82
      %p84 = scmp.ne.s32.totalorder %s73, %s76
      %p85 = scmp.eq.s32.totalorder %s15, 23
      %p86 = por %p84, %p85
      %p87 = scmp.ne.s32.totalorder %s76, %s77
      %p88 = scmp.eq.s32.totalorder %s15, 0
      %p89 = por %p87, %p88
      %p90 = scmp.ne.s32.totalorder %s76, %s77
      %p91 = scmp.eq.s32.totalorder %s16, 23
      %p92 = por %p90, %p91
      %p94 = scmp.ne.s32.totalorder %s77, %s93
      %p95 = scmp.eq.s32.totalorder %s16, 0
      %p96 = por %p94, %p95
      %p97 = scmp.le.s32.totalorder 1, %s10
      %p98 = scmp.lt.s32.totalorder %s10, 25
      %p99 = pnand %p97, %p98
      %p100 = pneg %p99
      // Predicated region
      $region9: #{tpu_custom_call.1} parent=5 // pred_check
        _
      $region10: #{tpu_custom_call.1} parent=5 // pred_check_branch
        %102 = sbr.rel (%p99) target = $region12
      $region11: #{tpu_custom_call.1} parent=5 // pred_region
        %s103 = ssub.s32 %s10, 1
      $region12: #{tpu_custom_call.1} parent=5 // pred_fallthru
        _
      %p104 = scmp.lt.s32.totalorder %s10, 24
      // Predicated region
      $region13: #{tpu_custom_call.1} parent=5 // pred_check
        %p105 = pneg %p104
      $region14: #{tpu_custom_call.1} parent=5 // pred_check_branch
        %107 = sbr.rel (%p105) target = $region16
      $region15: #{tpu_custom_call.1} parent=5 // pred_region
        // Predicated region
        $region17: #{tpu_custom_call.1} parent=15 // pred_check
          %p108 = pneg %p53
        $region18: #{tpu_custom_call.1} parent=15 // pred_check_branch
          %110 = sbr.rel (%p108) target = $region20
        $region19: #{tpu_custom_call.1} parent=15 // pred_region
          %s111 = sand.u32 %s43, 1
          %s112 = scalar_lea.sflag [#allocation3], %s111
          %s113 = sand.u32 %s43, 1
          %s114 = smul.addr %s113, 64
          %s115 = scalar_lea.vmem [#allocation2], %s114
          %s116 = smul.u32 8, %s19
          %s118 = ssub.s32 1024, 1024
          %119 = vsyncadd %s112, %s118
          %s120 = smul.addr %s18, 96
          %s121 = sadd.s32 %s116, %s120
          %s122 = smul.addr %s17, 96
          %s123 = sadd.s32 %s121, %s122
          %s124 = smul.addr %s123, 128
          %s125 = scalar_lea.hbm %s0, %s124
          %s127 = sshll.u32 %s115, 4
          %s128 = int_to_ptr.vmem [resolvable:$true] %s127
          %130 = dma.hbm_to_vmem [thread:$0]  %s125, 1024, %s128, %s112
        $region20: #{tpu_custom_call.1} parent=15 // pred_fallthru
          _
      $region16: #{tpu_custom_call.1} parent=5 // pred_fallthru
        _
      %p131 = scmp.le.s32.totalorder 1, %s10
      %p132 = scmp.lt.s32.totalorder %s10, 25
      %p133 = pnand %p131, %p132
      %p134 = pneg %p133
      // Predicated region
      $region21: #{tpu_custom_call.1} parent=5 // pred_check
        _
      $region22: #{tpu_custom_call.1} parent=5 // pred_check_branch
        %136 = sbr.rel (%p133) target = $region24
      $region23: #{tpu_custom_call.1} parent=5 // pred_region
        %s137 = ssub.s32 %s10, 1
        %s138 = sand.u32 %s46, 1
        %s139 = scalar_lea.sflag [#allocation3], %s138
        %s140 = sand.u32 %s46, 1
        %s141 = smul.addr %s140, 64
        %s142 = scalar_lea.vmem [#allocation2], %s141
        // Predicated region
        $region25: #{tpu_custom_call.1} parent=23 // pred_check
          %p143 = pneg %p59
        $region26: #{tpu_custom_call.1} parent=23 // pred_check_branch
          %145 = sbr.rel (%p143) target = $region28
        $region27: #{tpu_custom_call.1} parent=23 // pred_region
          %146 = dma.done %s139, 1024
        $region28: #{tpu_custom_call.1} parent=23 // pred_fallthru
          _
        %s147 = sand.u32 %s46, 1
        %s148 = scalar_lea.sflag [#allocation3], %s147
        %s149 = sand.u32 %s46, 1
        %s150 = smul.addr %s149, 64
        %s151 = scalar_lea.vmem [#allocation2], %s150
        %p152 = pneg %p59
        %p153 = pneg %p56
        %p154 = pneg %p89
        %p155 = pneg %p86
        %s156 = smul.u32 128, %s22
        %p157 = scmp.lt.s32.totalorder %s20, 1
        %s158 = scalar_select %p157, %s20, 1
        %p159 = scmp.lt.s32.totalorder %s156, 1535
        %s160 = scalar_select %p159, %s156, 1535
        %p161 = scmp.lt.s32.totalorder %s21, 0
        %s162 = scalar_select %p161, %s21, 0
        %s163 = sadd.s32 %s162, %s160
        %s164 = smul.addr %s158, 1536
        %s165 = sadd.s32 %s163, %s164
        %s166 = smul.addr %s165, 8
        %s167 = scalar_lea.vmem %s1, %s166
        %s168 = smul.u32 8, %s22
        %s169 = smul.u32 128, %s22
        %p170 = scmp.lt.s32.totalorder %s20, 1
        %s171 = scalar_select %p170, %s20, 1
        %p172 = scmp.lt.s32.totalorder %s169, 1535
        %s173 = scalar_select %p172, %s169, 1535
        %p174 = scmp.lt.s32.totalorder %s21, 0
        %s175 = scalar_select %p174, %s21, 0
        %s176 = sadd.s32 %s175, %s173
        %s177 = smul.addr %s171, 1536
        %s178 = sadd.s32 %s176, %s177
        %s179 = smul.addr %s178, 8
        %s180 = scalar_lea.vmem %s1, %s179
        %s181 = smul.u32 128, %s22
        %v182 = vld [vmem:[%s142] sm:$0xff]
        %v183 = vld [vmem:[%s142 + $0x8] sm:$0xff]
        %v184 = vld [vmem:[%s142 + $0x10] sm:$0xff]
        %v185 = vld [vmem:[%s142 + $0x18] sm:$0xff]
        %v186 = vld [vmem:[%s142 + $0x20] sm:$0xff]
        %v187 = vld [vmem:[%s142 + $0x28] sm:$0xff]
        %v188 = vld [vmem:[%s142 + $0x30] sm:$0xff]
        %v189 = vld [vmem:[%s142 + $0x38] sm:$0xff]
        %190 = vxpose.xlu0.b32.start [1/16] %v182, 128
        %191 = vxpose.xlu0.b32.cont [2/16] 0.0, 128
        %192 = vxpose.xlu0.b32.cont [3/16] 0.0, 128
        %193 = vxpose.xlu0.b32.cont [4/16] 0.0, 128
        %194 = vxpose.xlu0.b32.cont [5/16] 0.0, 128
        %195 = vxpose.xlu0.b32.cont [6/16] 0.0, 128
        %196 = vxpose.xlu0.b32.cont [7/16] 0.0, 128
        %197 = vxpose.xlu0.b32.cont [8/16] 0.0, 128
        %198 = vxpose.xlu0.b32.cont [9/16] 0.0, 128
        %199 = vxpose.xlu0.b32.cont [10/16] 0.0, 128
        %200 = vxpose.xlu0.b32.cont [11/16] 0.0, 128
        %201 = vxpose.xlu0.b32.cont [12/16] 0.0, 128
        %202 = vxpose.xlu0.b32.cont [13/16] 0.0, 128
        %203 = vxpose.xlu0.b32.cont [14/16] 0.0, 128
        %204 = vxpose.xlu0.b32.cont [15/16] 0.0, 128
        %205 = vxpose.xlu0.b32.end [16/16] 0.0, 128
        %v206 = vpop.trf.xlu0
        %v207 = vpop.trf.xlu0
        %v208 = vpop.trf.xlu0
        %v209 = vpop.trf.xlu0
        %v210 = vpop.trf.xlu0
        %v211 = vpop.trf.xlu0
        %v212 = vpop.trf.xlu0
        %v213 = vpop.trf.xlu0
        %v214 = vpop.trf.xlu0
        %v215 = vpop.trf.xlu0
        %v216 = vpop.trf.xlu0
        %v217 = vpop.trf.xlu0
        %v218 = vpop.trf.xlu0
        %v219 = vpop.trf.xlu0
        %v220 = vpop.trf.xlu0
        %v221 = vpop.trf.xlu0
        %222 = vxpose.xlu0.b32.start [1/16] %v183, 128
        %223 = vxpose.xlu0.b32.cont [2/16] 0.0, 128
        %224 = vxpose.xlu0.b32.cont [3/16] 0.0, 128
        %225 = vxpose.xlu0.b32.cont [4/16] 0.0, 128
        %226 = vxpose.xlu0.b32.cont [5/16] 0.0, 128
        %227 = vxpose.xlu0.b32.cont [6/16] 0.0, 128
        %228 = vxpose.xlu0.b32.cont [7/16] 0.0, 128
        %229 = vxpose.xlu0.b32.cont [8/16] 0.0, 128
        %230 = vxpose.xlu0.b32.cont [9/16] 0.0, 128
        %231 = vxpose.xlu0.b32.cont [10/16] 0.0, 128
        %232 = vxpose.xlu0.b32.cont [11/16] 0.0, 128
        %233 = vxpose.xlu0.b32.cont [12/16] 0.0, 128
        %234 = vxpose.xlu0.b32.cont [13/16] 0.0, 128
        %235 = vxpose.xlu0.b32.cont [14/16] 0.0, 128
        %236 = vxpose.xlu0.b32.cont [15/16] 0.0, 128
        %237 = vxpose.xlu0.b32.end [16/16] 0.0, 128
        %v238 = vpop.trf.xlu0
        %v239 = vpop.trf.xlu0
        %v240 = vpop.trf.xlu0
        %v241 = vpop.trf.xlu0
        %v242 = vpop.trf.xlu0
        %v243 = vpop.trf.xlu0
        %v244 = vpop.trf.xlu0
        %v245 = vpop.trf.xlu0
        %v246 = vpop.trf.xlu0
        %v247 = vpop.trf.xlu0
        %v248 = vpop.trf.xlu0
        %v249 = vpop.trf.xlu0
        %v250 = vpop.trf.xlu0
        %v251 = vpop.trf.xlu0
        %v252 = vpop.trf.xlu0
        %v253 = vpop.trf.xlu0
        %254 = vxpose.xlu0.b32.start [1/16] %v184, 128
        %255 = vxpose.xlu0.b32.cont [2/16] 0.0, 128
        %256 = vxpose.xlu0.b32.cont [3/16] 0.0, 128
        %257 = vxpose.xlu0.b32.cont [4/16] 0.0, 128
        %258 = vxpose.xlu0.b32.cont [5/16] 0.0, 128
        %259 = vxpose.xlu0.b32.cont [6/16] 0.0, 128
        %260 = vxpose.xlu0.b32.cont [7/16] 0.0, 128
        %261 = vxpose.xlu0.b32.cont [8/16] 0.0, 128
        %262 = vxpose.xlu0.b32.cont [9/16] 0.0, 128
        %263 = vxpose.xlu0.b32.cont [10/16] 0.0, 128
        %264 = vxpose.xlu0.b32.cont [11/16] 0.0, 128
        %265 = vxpose.xlu0.b32.cont [12/16] 0.0, 128
        %266 = vxpose.xlu0.b32.cont [13/16] 0.0, 128
        %267 = vxpose.xlu0.b32.cont [14/16] 0.0, 128
        %268 = vxpose.xlu0.b32.cont [15/16] 0.0, 128
        %269 = vxpose.xlu0.b32.end [16/16] 0.0, 128
        %v270 = vpop.trf.xlu0
        %v271 = vpop.trf.xlu0
        %v272 = vpop.trf.xlu0
        %v273 = vpop.trf.xlu0
        %v274 = vpop.trf.xlu0
        %v275 = vpop.trf.xlu0
        %v276 = vpop.trf.xlu0
        %v277 = vpop.trf.xlu0
        %v278 = vpop.trf.xlu0
        %v279 = vpop.trf.xlu0
        %v280 = vpop.trf.xlu0
        %v281 = vpop.trf.xlu0
        %v282 = vpop.trf.xlu0
        %v283 = vpop.trf.xlu0
        %v284 = vpop.trf.xlu0
        %v285 = vpop.trf.xlu0
        %286 = vxpose.xlu0.b32.start [1/16] %v185, 128
        %287 = vxpose.xlu0.b32.cont [2/16] 0.0, 128
        %288 = vxpose.xlu0.b32.cont [3/16] 0.0, 128
        %289 = vxpose.xlu0.b32.cont [4/16] 0.0, 128
        %290 = vxpose.xlu0.b32.cont [5/16] 0.0, 128
        %291 = vxpose.xlu0.b32.cont [6/16] 0.0, 128
        %292 = vxpose.xlu0.b32.cont [7/16] 0.0, 128
        %293 = vxpose.xlu0.b32.cont [8/16] 0.0, 128
        %294 = vxpose.xlu0.b32.cont [9/16] 0.0, 128
        %295 = vxpose.xlu0.b32.cont [10/16] 0.0, 128
        %296 = vxpose.xlu0.b32.cont [11/16] 0.0, 128
        %297 = vxpose.xlu0.b32.cont [12/16] 0.0, 128
        %298 = vxpose.xlu0.b32.cont [13/16] 0.0, 128
        %299 = vxpose.xlu0.b32.cont [14/16] 0.0, 128
        %300 = vxpose.xlu0.b32.cont [15/16] 0.0, 128
        %301 = vxpose.xlu0.b32.end [16/16] 0.0, 128
        %v302 = vpop.trf.xlu0
        %v303 = vpop.trf.xlu0
        %v304 = vpop.trf.xlu0
        %v305 = vpop.trf.xlu0
        %v306 = vpop.trf.xlu0
        %v307 = vpop.trf.xlu0
        %v308 = vpop.trf.xlu0
        %v309 = vpop.trf.xlu0
        %v310 = vpop.trf.xlu0
        %v311 = vpop.trf.xlu0
        %v312 = vpop.trf.xlu0
        %v313 = vpop.trf.xlu0
        %v314 = vpop.trf.xlu0
        %v315 = vpop.trf.xlu0
        %v316 = vpop.trf.xlu0
        %v317 = vpop.trf.xlu0
        %318 = vxpose.xlu0.b32.start [1/16] %v186, 128
        %319 = vxpose.xlu0.b32.cont [2/16] 0.0, 128
        %320 = vxpose.xlu0.b32.cont [3/16] 0.0, 128
        %321 = vxpose.xlu0.b32.cont [4/16] 0.0, 128
        %322 = vxpose.xlu0.b32.cont [5/16] 0.0, 128
        %323 = vxpose.xlu0.b32.cont [6/16] 0.0, 128
        %324 = vxpose.xlu0.b32.cont [7/16] 0.0, 128
        %325 = vxpose.xlu0.b32.cont [8/16] 0.0, 128
        %326 = vxpose.xlu0.b32.cont [9/16] 0.0, 128
        %327 = vxpose.xlu0.b32.cont [10/16] 0.0, 128
        %328 = vxpose.xlu0.b32.cont [11/16] 0.0, 128
        %329 = vxpose.xlu0.b32.cont [12/16] 0.0, 128
        %330 = vxpose.xlu0.b32.cont [13/16] 0.0, 128
        %331 = vxpose.xlu0.b32.cont [14/16] 0.0, 128
        %332 = vxpose.xlu0.b32.cont [15/16] 0.0, 128
        %333 = vxpose.xlu0.b32.end [16/16] 0.0, 128
        %v334 = vpop.trf.xlu0
        %v335 = vpop.trf.xlu0
        %v336 = vpop.trf.xlu0
        %v337 = vpop.trf.xlu0
        %v338 = vpop.trf.xlu0
        %v339 = vpop.trf.xlu0
        %v340 = vpop.trf.xlu0
        %v341 = vpop.trf.xlu0
        %v342 = vpop.trf.xlu0
        %v343 = vpop.trf.xlu0
        %v344 = vpop.trf.xlu0
        %v345 = vpop.trf.xlu0
        %v346 = vpop.trf.xlu0
        %v347 = vpop.trf.xlu0
        %v348 = vpop.trf.xlu0
        %v349 = vpop.trf.xlu0
        %350 = vxpose.xlu0.b32.start [1/16] %v187, 128
        %351 = vxpose.xlu0.b32.cont [2/16] 0.0, 128
        %352 = vxpose.xlu0.b32.cont [3/16] 0.0, 128
        %353 = vxpose.xlu0.b32.cont [4/16] 0.0, 128
        %354 = vxpose.xlu0.b32.cont [5/16] 0.0, 128
        %355 = vxpose.xlu0.b32.cont [6/16] 0.0, 128
        %356 = vxpose.xlu0.b32.cont [7/16] 0.0, 128
        %357 = vxpose.xlu0.b32.cont [8/16] 0.0, 128
        %358 = vxpose.xlu0.b32.cont [9/16] 0.0, 128
        %359 = vxpose.xlu0.b32.cont [10/16] 0.0, 128
        %360 = vxpose.xlu0.b32.cont [11/16] 0.0, 128
        %361 = vxpose.xlu0.b32.cont [12/16] 0.0, 128
        %362 = vxpose.xlu0.b32.cont [13/16] 0.0, 128
        %363 = vxpose.xlu0.b32.cont [14/16] 0.0, 128
        %364 = vxpose.xlu0.b32.cont [15/16] 0.0, 128
        %365 = vxpose.xlu0.b32.end [16/16] 0.0, 128
        %v366 = vpop.trf.xlu0
        %v367 = vpop.trf.xlu0
        %v368 = vpop.trf.xlu0
        %v369 = vpop.trf.xlu0
        %v370 = vpop.trf.xlu0
        %v371 = vpop.trf.xlu0
        %v372 = vpop.trf.xlu0
        %v373 = vpop.trf.xlu0
        %v374 = vpop.trf.xlu0
        %v375 = vpop.trf.xlu0
        %v376 = vpop.trf.xlu0
        %v377 = vpop.trf.xlu0
        %v378 = vpop.trf.xlu0
        %v379 = vpop.trf.xlu0
        %v380 = vpop.trf.xlu0
        %v381 = vpop.trf.xlu0
        %382 = vxpose.xlu0.b32.start [1/16] %v188, 128
        %383 = vxpose.xlu0.b32.cont [2/16] 0.0, 128
        %384 = vxpose.xlu0.b32.cont [3/16] 0.0, 128
        %385 = vxpose.xlu0.b32.cont [4/16] 0.0, 128
        %386 = vxpose.xlu0.b32.cont [5/16] 0.0, 128
        %387 = vxpose.xlu0.b32.cont [6/16] 0.0, 128
        %388 = vxpose.xlu0.b32.cont [7/16] 0.0, 128
        %389 = vxpose.xlu0.b32.cont [8/16] 0.0, 128
        %390 = vxpose.xlu0.b32.cont [9/16] 0.0, 128
        %391 = vxpose.xlu0.b32.cont [10/16] 0.0, 128
        %392 = vxpose.xlu0.b32.cont [11/16] 0.0, 128
        %393 = vxpose.xlu0.b32.cont [12/16] 0.0, 128
        %394 = vxpose.xlu0.b32.cont [13/16] 0.0, 128
        %395 = vxpose.xlu0.b32.cont [14/16] 0.0, 128
        %396 = vxpose.xlu0.b32.cont [15/16] 0.0, 128
        %397 = vxpose.xlu0.b32.end [16/16] 0.0, 128
        %v398 = vpop.trf.xlu0
        %v399 = vpop.trf.xlu0
        %v400 = vpop.trf.xlu0
        %v401 = vpop.trf.xlu0
        %v402 = vpop.trf.xlu0
        %v403 = vpop.trf.xlu0
        %v404 = vpop.trf.xlu0
        %v405 = vpop.trf.xlu0
        %v406 = vpop.trf.xlu0
        %v407 = vpop.trf.xlu0
        %v408 = vpop.trf.xlu0
        %v409 = vpop.trf.xlu0
        %v410 = vpop.trf.xlu0
        %v411 = vpop.trf.xlu0
        %v412 = vpop.trf.xlu0
        %v413 = vpop.trf.xlu0
        %414 = vxpose.xlu0.b32.start [1/16] %v189, 128
        %415 = vxpose.xlu0.b32.cont [2/16] 0.0, 128
        %416 = vxpose.xlu0.b32.cont [3/16] 0.0, 128
        %417 = vxpose.xlu0.b32.cont [4/16] 0.0, 128
        %418 = vxpose.xlu0.b32.cont [5/16] 0.0, 128
        %419 = vxpose.xlu0.b32.cont [6/16] 0.0, 128
        %420 = vxpose.xlu0.b32.cont [7/16] 0.0, 128
        %421 = vxpose.xlu0.b32.cont [8/16] 0.0, 128
        %422 = vxpose.xlu0.b32.cont [9/16] 0.0, 128
        %423 = vxpose.xlu0.b32.cont [10/16] 0.0, 128
        %424 = vxpose.xlu0.b32.cont [11/16] 0.0, 128
        %425 = vxpose.xlu0.b32.cont [12/16] 0.0, 128
        %426 = vxpose.xlu0.b32.cont [13/16] 0.0, 128
        %427 = vxpose.xlu0.b32.cont [14/16] 0.0, 128
        %428 = vxpose.xlu0.b32.cont [15/16] 0.0, 128
        %429 = vxpose.xlu0.b32.end [16/16] 0.0, 128
        %v430 = vpop.trf.xlu0
        %v431 = vpop.trf.xlu0
        %v432 = vpop.trf.xlu0
        %v433 = vpop.trf.xlu0
        %v434 = vpop.trf.xlu0
        %v435 = vpop.trf.xlu0
        %v436 = vpop.trf.xlu0
        %v437 = vpop.trf.xlu0
        %v438 = vpop.trf.xlu0
        %v439 = vpop.trf.xlu0
        %v440 = vpop.trf.xlu0
        %v441 = vpop.trf.xlu0
        %v442 = vpop.trf.xlu0
        %v443 = vpop.trf.xlu0
        %v444 = vpop.trf.xlu0
        %v445 = vpop.trf.xlu0
        %vm446 = vcmask 64512
        %447 = vst.msk [vmem:[%s180] sm:$0xff] %vm446, %v206
        %448 = vst.msk [vmem:[%s180 + $0x8] sm:$0xff] %vm446, %v207
        %449 = vst.msk [vmem:[%s180 + $0x10] sm:$0xff] %vm446, %v208
        %450 = vst.msk [vmem:[%s180 + $0x18] sm:$0xff] %vm446, %v209
        %451 = vst.msk [vmem:[%s180 + $0x20] sm:$0xff] %vm446, %v210
        %452 = vst.msk [vmem:[%s180 + $0x28] sm:$0xff] %vm446, %v211
        %453 = vst.msk [vmem:[%s180 + $0x30] sm:$0xff] %vm446, %v212
        %454 = vst.msk [vmem:[%s180 + $0x38] sm:$0xff] %vm446, %v213
        %455 = vst.msk [vmem:[%s180 + $0x40] sm:$0xff] %vm446, %v214
        %456 = vst.msk [vmem:[%s180 + $0x48] sm:$0xff] %vm446, %v215
        %457 = vst.msk [vmem:[%s180 + $0x50] sm:$0xff] %vm446, %v216
        %458 = vst.msk [vmem:[%s180 + $0x58] sm:$0xff] %vm446, %v217
        %459 = vst.msk [vmem:[%s180 + $0x60] sm:$0xff] %vm446, %v218
        %460 = vst.msk [vmem:[%s180 + $0x68] sm:$0xff] %vm446, %v219
        %461 = vst.msk [vmem:[%s180 + $0x70] sm:$0xff] %vm446, %v220
        %462 = vst.msk [vmem:[%s180 + $0x78] sm:$0xff] %vm446, %v221
        %463 = vst.msk [vmem:[%s180 + $0x80] sm:$0xff] %vm446, %v238
        %464 = vst.msk [vmem:[%s180 + $0x88] sm:$0xff] %vm446, %v239
        %465 = vst.msk [vmem:[%s180 + $0x90] sm:$0xff] %vm446, %v240
        %466 = vst.msk [vmem:[%s180 + $0x98] sm:$0xff] %vm446, %v241
        %467 = vst.msk [vmem:[%s180 + $0xa0] sm:$0xff] %vm446, %v242
        %468 = vst.msk [vmem:[%s180 + $0xa8] sm:$0xff] %vm446, %v243
        %469 = vst.msk [vmem:[%s180 + $0xb0] sm:$0xff] %vm446, %v244
        %470 = vst.msk [vmem:[%s180 + $0xb8] sm:$0xff] %vm446, %v245
        %471 = vst.msk [vmem:[%s180 + $0xc0] sm:$0xff] %vm446, %v246
        %472 = vst.msk [vmem:[%s180 + $0xc8] sm:$0xff] %vm446, %v247
        %473 = vst.msk [vmem:[%s180 + $0xd0] sm:$0xff] %vm446, %v248
        %474 = vst.msk [vmem:[%s180 + $0xd8] sm:$0xff] %vm446, %v249
        %475 = vst.msk [vmem:[%s180 + $0xe0] sm:$0xff] %vm446, %v250
        %476 = vst.msk [vmem:[%s180 + $0xe8] sm:$0xff] %vm446, %v251
        %477 = vst.msk [vmem:[%s180 + $0xf0] sm:$0xff] %vm446, %v252
        %478 = vst.msk [vmem:[%s180 + $0xf8] sm:$0xff] %vm446, %v253
        %479 = vst.msk [vmem:[%s180 + $0x100] sm:$0xff] %vm446, %v270
        %480 = vst.msk [vmem:[%s180 + $0x108] sm:$0xff] %vm446, %v271
        %481 = vst.msk [vmem:[%s180 + $0x110] sm:$0xff] %vm446, %v272
        %482 = vst.msk [vmem:[%s180 + $0x118] sm:$0xff] %vm446, %v273
        %483 = vst.msk [vmem:[%s180 + $0x120] sm:$0xff] %vm446, %v274
        %484 = vst.msk [vmem:[%s180 + $0x128] sm:$0xff] %vm446, %v275
        %485 = vst.msk [vmem:[%s180 + $0x130] sm:$0xff] %vm446, %v276
        %486 = vst.msk [vmem:[%s180 + $0x138] sm:$0xff] %vm446, %v277
        %487 = vst.msk [vmem:[%s180 + $0x140] sm:$0xff] %vm446, %v278
        %488 = vst.msk [vmem:[%s180 + $0x148] sm:$0xff] %vm446, %v279
        %489 = vst.msk [vmem:[%s180 + $0x150] sm:$0xff] %vm446, %v280
        %490 = vst.msk [vmem:[%s180 + $0x158] sm:$0xff] %vm446, %v281
        %491 = vst.msk [vmem:[%s180 + $0x160] sm:$0xff] %vm446, %v282
        %492 = vst.msk [vmem:[%s180 + $0x168] sm:$0xff] %vm446, %v283
        %493 = vst.msk [vmem:[%s180 + $0x170] sm:$0xff] %vm446, %v284
        %494 = vst.msk [vmem:[%s180 + $0x178] sm:$0xff] %vm446, %v285
        %495 = vst.msk [vmem:[%s180 + $0x180] sm:$0xff] %vm446, %v302
        %496 = vst.msk [vmem:[%s180 + $0x188] sm:$0xff] %vm446, %v303
        %497 = vst.msk [vmem:[%s180 + $0x190] sm:$0xff] %vm446, %v304
        %498 = vst.msk [vmem:[%s180 + $0x198] sm:$0xff] %vm446, %v305
        %499 = vst.msk [vmem:[%s180 + $0x1a0] sm:$0xff] %vm446, %v306
        %500 = vst.msk [vmem:[%s180 + $0x1a8] sm:$0xff] %vm446, %v307
        %501 = vst.msk [vmem:[%s180 + $0x1b0] sm:$0xff] %vm446, %v308
        %502 = vst.msk [vmem:[%s180 + $0x1b8] sm:$0xff] %vm446, %v309
        %503 = vst.msk [vmem:[%s180 + $0x1c0] sm:$0xff] %vm446, %v310
        %504 = vst.msk [vmem:[%s180 + $0x1c8] sm:$0xff] %vm446, %v311
        %505 = vst.msk [vmem:[%s180 + $0x1d0] sm:$0xff] %vm446, %v312
        %506 = vst.msk [vmem:[%s180 + $0x1d8] sm:$0xff] %vm446, %v313
        %507 = vst.msk [vmem:[%s180 + $0x1e0] sm:$0xff] %vm446, %v314
        %508 = vst.msk [vmem:[%s180 + $0x1e8] sm:$0xff] %vm446, %v315
        %509 = vst.msk [vmem:[%s180 + $0x1f0] sm:$0xff] %vm446, %v316
        %510 = vst.msk [vmem:[%s180 + $0x1f8] sm:$0xff] %vm446, %v317
        %511 = vst.msk [vmem:[%s180 + $0x200] sm:$0xff] %vm446, %v334
        %512 = vst.msk [vmem:[%s180 + $0x208] sm:$0xff] %vm446, %v335
        %513 = vst.msk [vmem:[%s180 + $0x210] sm:$0xff] %vm446, %v336
        %514 = vst.msk [vmem:[%s180 + $0x218] sm:$0xff] %vm446, %v337
        %515 = vst.msk [vmem:[%s180 + $0x220] sm:$0xff] %vm446, %v338
        %516 = vst.msk [vmem:[%s180 + $0x228] sm:$0xff] %vm446, %v339
        %517 = vst.msk [vmem:[%s180 + $0x230] sm:$0xff] %vm446, %v340
        %518 = vst.msk [vmem:[%s180 + $0x238] sm:$0xff] %vm446, %v341
        %519 = vst.msk [vmem:[%s180 + $0x240] sm:$0xff] %vm446, %v342
        %520 = vst.msk [vmem:[%s180 + $0x248] sm:$0xff] %vm446, %v343
        %521 = vst.msk [vmem:[%s180 + $0x250] sm:$0xff] %vm446, %v344
        %522 = vst.msk [vmem:[%s180 + $0x258] sm:$0xff] %vm446, %v345
        %523 = vst.msk [vmem:[%s180 + $0x260] sm:$0xff] %vm446, %v346
        %524 = vst.msk [vmem:[%s180 + $0x268] sm:$0xff] %vm446, %v347
        %525 = vst.msk [vmem:[%s180 + $0x270] sm:$0xff] %vm446, %v348
        %526 = vst.msk [vmem:[%s180 + $0x278] sm:$0xff] %vm446, %v349
        %527 = vst.msk [vmem:[%s180 + $0x280] sm:$0xff] %vm446, %v366
        %528 = vst.msk [vmem:[%s180 + $0x288] sm:$0xff] %vm446, %v367
        %529 = vst.msk [vmem:[%s180 + $0x290] sm:$0xff] %vm446, %v368
        %530 = vst.msk [vmem:[%s180 + $0x298] sm:$0xff] %vm446, %v369
        %531 = vst.msk [vmem:[%s180 + $0x2a0] sm:$0xff] %vm446, %v370
        %532 = vst.msk [vmem:[%s180 + $0x2a8] sm:$0xff] %vm446, %v371
        %533 = vst.msk [vmem:[%s180 + $0x2b0] sm:$0xff] %vm446, %v372
        %534 = vst.msk [vmem:[%s180 + $0x2b8] sm:$0xff] %vm446, %v373
        %535 = vst.msk [vmem:[%s180 + $0x2c0] sm:$0xff] %vm446, %v374
        %536 = vst.msk [vmem:[%s180 + $0x2c8] sm:$0xff] %vm446, %v375
        %537 = vst.msk [vmem:[%s180 + $0x2d0] sm:$0xff] %vm446, %v376
        %538 = vst.msk [vmem:[%s180 + $0x2d8] sm:$0xff] %vm446, %v377
        %539 = vst.msk [vmem:[%s180 + $0x2e0] sm:$0xff] %vm446, %v378
        %540 = vst.msk [vmem:[%s180 + $0x2e8] sm:$0xff] %vm446, %v379
        %541 = vst.msk [vmem:[%s180 + $0x2f0] sm:$0xff] %vm446, %v380
        %542 = vst.msk [vmem:[%s180 + $0x2f8] sm:$0xff] %vm446, %v381
        %543 = vst.msk [vmem:[%s180 + $0x300] sm:$0xff] %vm446, %v398
        %544 = vst.msk [vmem:[%s180 + $0x308] sm:$0xff] %vm446, %v399
        %545 = vst.msk [vmem:[%s180 + $0x310] sm:$0xff] %vm446, %v400
        %546 = vst.msk [vmem:[%s180 + $0x318] sm:$0xff] %vm446, %v401
        %547 = vst.msk [vmem:[%s180 + $0x320] sm:$0xff] %vm446, %v402
        %548 = vst.msk [vmem:[%s180 + $0x328] sm:$0xff] %vm446, %v403
        %549 = vst.msk [vmem:[%s180 + $0x330] sm:$0xff] %vm446, %v404
        %550 = vst.msk [vmem:[%s180 + $0x338] sm:$0xff] %vm446, %v405
        %551 = vst.msk [vmem:[%s180 + $0x340] sm:$0xff] %vm446, %v406
        %552 = vst.msk [vmem:[%s180 + $0x348] sm:$0xff] %vm446, %v407
        %553 = vst.msk [vmem:[%s180 + $0x350] sm:$0xff] %vm446, %v408
        %554 = vst.msk [vmem:[%s180 + $0x358] sm:$0xff] %vm446, %v409
        %555 = vst.msk [vmem:[%s180 + $0x360] sm:$0xff] %vm446, %v410
        %556 = vst.msk [vmem:[%s180 + $0x368] sm:$0xff] %vm446, %v411
        %557 = vst.msk [vmem:[%s180 + $0x370] sm:$0xff] %vm446, %v412
        %558 = vst.msk [vmem:[%s180 + $0x378] sm:$0xff] %vm446, %v413
        %559 = vst.msk [vmem:[%s180 + $0x380] sm:$0xff] %vm446, %v430
        %560 = vst.msk [vmem:[%s180 + $0x388] sm:$0xff] %vm446, %v431
        %561 = vst.msk [vmem:[%s180 + $0x390] sm:$0xff] %vm446, %v432
        %562 = vst.msk [vmem:[%s180 + $0x398] sm:$0xff] %vm446, %v433
        %563 = vst.msk [vmem:[%s180 + $0x3a0] sm:$0xff] %vm446, %v434
        %564 = vst.msk [vmem:[%s180 + $0x3a8] sm:$0xff] %vm446, %v435
        %565 = vst.msk [vmem:[%s180 + $0x3b0] sm:$0xff] %vm446, %v436
        %566 = vst.msk [vmem:[%s180 + $0x3b8] sm:$0xff] %vm446, %v437
        %567 = vst.msk [vmem:[%s180 + $0x3c0] sm:$0xff] %vm446, %v438
        %568 = vst.msk [vmem:[%s180 + $0x3c8] sm:$0xff] %vm446, %v439
        %569 = vst.msk [vmem:[%s180 + $0x3d0] sm:$0xff] %vm446, %v440
        %570 = vst.msk [vmem:[%s180 + $0x3d8] sm:$0xff] %vm446, %v441
        %571 = vst.msk [vmem:[%s180 + $0x3e0] sm:$0xff] %vm446, %v442
        %572 = vst.msk [vmem:[%s180 + $0x3e8] sm:$0xff] %vm446, %v443
        %573 = vst.msk [vmem:[%s180 + $0x3f0] sm:$0xff] %vm446, %v444
        %574 = vst.msk [vmem:[%s180 + $0x3f8] sm:$0xff] %vm446, %v445
        %s575 = smul.u32 128, %s22
        %p576 = scmp.lt.s32.totalorder %s20, 1
        %s577 = scalar_select %p576, %s20, 1
        %p578 = scmp.lt.s32.totalorder %s575, 1535
        %s579 = scalar_select %p578, %s575, 1535
        %p580 = scmp.lt.s32.totalorder %s21, 0
        %s581 = scalar_select %p580, %s21, 0
        %s582 = sadd.s32 %s581, %s579
        %s583 = smul.addr %s577, 1536
        %s584 = sadd.s32 %s582, %s583
        %s585 = smul.addr %s584, 8
        %s586 = scalar_lea.vmem %s1, %s585
        // Predicated region
        $region29: #{tpu_custom_call.1} parent=23 // pred_check
          %p587 = pneg %p86
        $region30: #{tpu_custom_call.1} parent=23 // pred_check_branch
          %589 = sbr.rel (%p587) target = $region32
        $region31: #{tpu_custom_call.1} parent=23 // pred_region
          %s590 = smul.u32 128, %s22
        $region32: #{tpu_custom_call.1} parent=23 // pred_fallthru
          _
      $region24: #{tpu_custom_call.1} parent=5 // pred_fallthru
        _
      %p591 = scmp.le.s32.totalorder 2, %s10
      // Predicated region
      $region33: #{tpu_custom_call.1} parent=5 // pred_check
        %p592 = pneg %p591
      $region34: #{tpu_custom_call.1} parent=5 // pred_check_branch
        %594 = sbr.rel (%p592) target = $region36
      $region35: #{tpu_custom_call.1} parent=5 // pred_region
        %s595 = ssub.s32 %s10, 2
        // Predicated region
        $region37: #{tpu_custom_call.1} parent=35 // pred_check
          %p596 = pneg %p92
        $region38: #{tpu_custom_call.1} parent=35 // pred_check_branch
          %598 = sbr.rel (%p596) target = $region40
        $region39: #{tpu_custom_call.1} parent=35 // pred_region
          %s599 = smul.u32 128, %s25
          %p600 = scmp.lt.s32.totalorder %s23, 1
          %s601 = scalar_select %p600, %s23, 1
          %p602 = scmp.lt.s32.totalorder %s599, 1535
          %s603 = scalar_select %p602, %s599, 1535
          %p604 = scmp.lt.s32.totalorder %s24, 0
          %s605 = scalar_select %p604, %s24, 0
          %s606 = sadd.s32 %s605, %s603
          %s607 = smul.addr %s601, 1536
          %s608 = sadd.s32 %s606, %s607
          %s609 = smul.addr %s608, 8
          %s610 = scalar_lea.vmem %s1, %s609
        $region40: #{tpu_custom_call.1} parent=35 // pred_fallthru
          _
      $region36: #{tpu_custom_call.1} parent=5 // pred_fallthru
        _
    $region6: #{tpu_custom_call.1} parent=1 // loop_footer
      %s14 = sadd.s32 1, %s10
    $region7: #{tpu_custom_call.1} parent=1 // loop_footer_branch
      %9 = sbr.rel target = $region3
    $region8: #{tpu_custom_call.1} parent=1 // loop_exit
      _
    %611 = vsyncpa [#allocation3], 1
    %s612 = scalar_lea.sflag [#allocation3], 1
    %613 = vsyncpa %s612, 1

</llo_original>
